<compile_context>
chip_gen: v6e
topology: v6e:2x2x1
jax: 0.10.0
libtpu: 0.0.40
codegen_flags: <defaults>
</compile_context>

<pallas_src>
import functools
import math

import jax
import jax.numpy as jnp
from jax.experimental import pallas as pl
from jax.experimental.pallas import tpu as pltpu


_LANE = 128
_MIN_STEP_BYTES = 512 * 1024  # don't shrink blocks below this just to add grid steps


def _scaled_sqrt_sigmoid_kernel(x_ref, o_ref, *, max_scale, low_precision_eup):
    x = x_ref[...]
    if low_precision_eup:
        # v7x + bf16: EUP bf16 exp/rsqrt; error << bf16 output quantization.
        one = jnp.asarray(1.0, dtype=x.dtype)
        scale = jnp.asarray(max_scale, dtype=x.dtype)
        y = scale * jax.lax.rsqrt(one + jnp.exp(-x))
    else:
        xf = x.astype(jnp.float32)
        # sqrt(sigmoid(x)) == rsqrt(1 + exp(-x)); stable at both tails.
        y = max_scale * jax.lax.rsqrt(1.0 + jnp.exp(-xf))
    o_ref[...] = y.astype(o_ref.dtype)


def _chip_config():
    """Per-generation block-size target, scoped-VMEM limit, and v7x flag."""
    try:
        kind = jax.devices()[0].device_kind.lower()
    except Exception:
        kind = ""
    if "v7" in kind:
        # 64 MiB physical VMEM: 4 x 8 MiB pipeline buffers + scratch fit in 48.
        return {"block_bytes": 8 << 20, "vmem_limit": 48 << 20, "is_v7": True}
    if "v6" in kind:
        # 128 MiB physical; only the 32 MiB default scoped limit is in the way.
        return {"block_bytes": 4 << 20, "vmem_limit": 48 << 20, "is_v7": False}
    if "v5 lite" in kind or "v5e" in kind or "v5litepod" in kind:
        # 4 x 2 MiB buffers stay under the 16 MiB default scoped limit.
        return {"block_bytes": 2 << 20, "vmem_limit": None, "is_v7": False}
    return {"block_bytes": 2 << 20, "vmem_limit": None, "is_v7": False}


def _desired_steps(total_bytes):
    """Target grid-step count: enough to pipeline, never below ~512 KiB/block."""
    return int(max(1, min(8, total_bytes // _MIN_STEP_BYTES)))


def _round_down(v, q):
    return max(q, (v // q) * q)


def _even_tweak(extent, tile, quantum, want_even):
    """Best-effort: even step count along this axis (v7x dual-TC balance)."""
    if not want_even or tile >= extent or tile <= quantum:
        return tile
    steps = -(-extent // tile)
    if steps % 2 == 0:
        return tile
    cand = tile - quantum
    if cand >= quantum and (-(-extent // cand)) % 2 == 0:
        return cand
    return tile


def _tile_lanes(lanes, itemsize, sub, block_bytes):
    """Tile the lane dim (multiples of 128) only if one sub-row strip over-runs the budget."""
    if lanes > _LANE and lanes % _LANE == 0 and lanes * itemsize * sub > block_bytes:
        return min(lanes, _round_down(block_bytes // (sub * itemsize), _LANE))
    return lanes


def _tile_rows(rows, row_bytes, sub, block_bytes, desired, want_even):
    """Row tile (quantum `sub`): fits the VMEM budget, keeps the grid multi-step."""
    tr = _round_down(max(sub, block_bytes // max(1, row_bytes)), sub)
    max_steps = -(-rows // sub)
    target = min(desired, max_steps)
    if target > 1:
        tr = min(tr, _round_down(max(sub, rows // target), sub))
    if tr >= rows:
        return rows  # full extent is always a legal block dim
    return _even_tweak(rows, tr, sub, want_even)


def _tile_leading(L, slice_bytes, block_bytes, desired, want_even):
    """Leading-dim tile (quantum 1 slice)."""
    tl = min(L, max(1, block_bytes // max(1, slice_bytes)))
    target = min(desired, L)
    if target > 1:
        tl = min(tl, max(1, L // target))
    if tl < L:
        tl = _even_tweak(L, tl, 1, want_even)
    return tl


def scaled_sqrt_sigmoid(x: jax.Array, max_scale: float, *, block_bytes: int | None = None) -> jax.Array:
    """max_scale * sqrt(sigmoid(x)), elementwise, via a Pallas TPU kernel."""
    orig_shape = x.shape
    orig_dtype = x.dtype
    n = x.size
    if n == 0:
        return x

    cfg = _chip_config()
    if block_bytes is None:
        block_bytes = cfg["block_bytes"]
    want_even = cfg["is_v7"]
    vmem_limit = cfg["vmem_limit"]

    itemsize = jnp.dtype(orig_dtype).itemsize
    # Sublane packing quantum: 8 rows (4-byte), 16 (2-byte), 32 (1-byte) dtypes.
    sub = max(8, 32 // itemsize)
    low_precision_eup = bool(cfg["is_v7"] and orig_dtype == jnp.bfloat16)

    pad_tail = 0
    last = orig_shape[-1] if x.ndim >= 1 else 1

    if x.ndim >= 2 and last % _LANE == 0:
        C = last
        B = orig_shape[-2]
        L = math.prod(orig_shape[:-2])  # 1 when ndim == 2
        desired = _desired_steps(n * itemsize)
        if x.ndim == 2 or B % sub == 0:
            # Collapsing everything above the lane dim is layout-preserving here.
            rows = n // C
            xv = x if x.ndim == 2 else jnp.reshape(x, (rows, C))
            tc = _tile_lanes(C, itemsize, sub, block_bytes)
            tr = _tile_rows(rows, tc * itemsize, sub, block_bytes, desired, want_even)
            block_shape = (tr, tc)
            grid = (pl.cdiv(rows, tr), pl.cdiv(C, tc))
            index_map = lambda i, j: (i, j)
        else:
            # Second-minor dim not sublane-aligned: keep the last two dims
            # intact (leading-dim collapse is still a bitcast) and tile 3-D.
            xv = jnp.reshape(x, (L, B, C))
            slice_bytes = B * C * itemsize
            if slice_bytes <= block_bytes:
                tb, tc = B, C
                tl = _tile_leading(L, slice_bytes, block_bytes, desired, want_even)
            else:
                tl = 1
                tc = _tile_lanes(C, itemsize, sub, block_bytes)
                tb = _tile_rows(B, tc * itemsize, sub, block_bytes, desired, want_even)
            block_shape = (tl, tb, tc)
            grid = (pl.cdiv(L, tl), pl.cdiv(B, tb), pl.cdiv(C, tc))
            index_map = lambda i, j, k: (i, j, k)
    else:
        # Fallback: flatten to a lane-dense 2D slab (relayout is unavoidable
        # for unaligned minor dims).  Widest lane count dividing n avoids any
        # padding copy; truly ragged sizes pad the flat tail to 128.  The pad
        # + final slice is kept because the prefix/tail/concat alternative
        # costs the same number of HBM passes through XLA.
        lanes = None
        for cand in (1024, 512, 256, 128):
            if n % cand == 0:
                lanes = cand
                break
        x_flat = jnp.reshape(x, (-1,))
        if lanes is None:
            lanes = _LANE
            pad_tail = (-n) % lanes
            x_flat = jnp.concatenate([x_flat, jnp.zeros((pad_tail,), dtype=orig_dtype)])
        rows = x_flat.size // lanes
        xv = jnp.reshape(x_flat, (rows, lanes))
        desired = _desired_steps(rows * lanes * itemsize)
        tr = _tile_rows(rows, lanes * itemsize, sub, block_bytes, desired, want_even)
        block_shape = (tr, lanes)
        grid = (pl.cdiv(rows, tr),)
        index_map = lambda i: (i, 0)

    n_proc = math.prod(xv.shape)
    kernel = functools.partial(
        _scaled_sqrt_sigmoid_kernel,
        max_scale=float(max_scale),
        low_precision_eup=low_precision_eup,
    )

    cp_kwargs = dict(dimension_semantics=("parallel",) * len(grid))
    if vmem_limit is not None:
        cp_kwargs["vmem_limit_bytes"] = int(vmem_limit)

    out = pl.pallas_call(
        kernel,
        out_shape=jax.ShapeDtypeStruct(xv.shape, orig_dtype),
        grid_spec=pltpu.PrefetchScalarGridSpec(
            num_scalar_prefetch=0,
            grid=grid,
            in_specs=[pl.BlockSpec(block_shape, index_map)],
            out_specs=pl.BlockSpec(block_shape, index_map),
        ),
        compiler_params=pltpu.CompilerParams(**cp_kwargs),
        cost_estimate=pl.CostEstimate(
            flops=2 * n_proc,                      # add + mul per element
            transcendentals=2 * n_proc,            # exp + rsqrt per element
            bytes_accessed=2 * n_proc * itemsize,  # read + write
        ),
    )(xv)

    if out.shape == orig_shape:
        return out
    out_flat = jnp.reshape(out, (-1,))
    if pad_tail:
        out_flat = out_flat[:n]
    return jnp.reshape(out_flat, orig_shape)


if __name__ == "__main__":
    max_scale = 0.5  # module hyperparameter (deterministic, in-script)

    def ref(x):
        return max_scale * jnp.sqrt(jax.nn.sigmoid(x))

    # 1) Generic encoder output (batch, C, H, W): flat path, 1024-lane slab.
    x1 = jax.random.normal(jax.random.PRNGKey(0), (2, 4, 16, 16), dtype=jnp.float32)
    y1 = jax.block_until_ready(scaled_sqrt_sigmoid(x1, max_scale))
    assert y1.shape == x1.shape and y1.dtype == x1.dtype
    assert jnp.allclose(y1, ref(x1), atol=1e-5, rtol=1e-5)

    # 2) Ragged size (not a multiple of 128): padded fallback path.
    x2 = jax.random.normal(jax.random.PRNGKey(1), (3, 7, 5), dtype=jnp.float32)
    y2 = jax.block_until_ready(scaled_sqrt_sigmoid(x2, max_scale))
    assert y2.shape == x2.shape and y2.dtype == x2.dtype
    assert jnp.allclose(y2, ref(x2), atol=1e-5, rtol=1e-5)

    # 3) Lane-aligned 2D (seq, hidden): zero-copy (no reshape at all) path.
    x3 = jax.random.normal(jax.random.PRNGKey(2), (16, 256), dtype=jnp.float32)
    y3 = jax.block_until_ready(scaled_sqrt_sigmoid(x3, max_scale))
    assert y3.shape == x3.shape and y3.dtype == x3.dtype
    assert jnp.allclose(y3, ref(x3), atol=1e-5, rtol=1e-5)

    # 4) Lane-aligned last dim, unaligned second-minor dim: 3D bitcast path.
    x4 = jax.random.normal(jax.random.PRNGKey(3), (2, 3, 12, 256), dtype=jnp.float32)
    y4 = jax.block_until_ready(scaled_sqrt_sigmoid(x4, max_scale))
    assert y4.shape == x4.shape and y4.dtype == x4.dtype
    assert jnp.allclose(y4, ref(x4), atol=1e-5, rtol=1e-5)

    print("KERNEL_OK")
</pallas_src>

<mosaic_0001>
module attributes {stable_mosaic.version = 11 : i64} {
  func.func @_scaled_sqrt_sigmoid_kernel(%arg0: i32, %arg1: memref<2x1024xf32, #tpu.memory_space<vmem>>, %arg2: memref<2x1024xf32, #tpu.memory_space<vmem>>) attributes {dimension_semantics = [#tpu.dimension_semantics<parallel>], iteration_bounds = array<i64: 1>, scalar_prefetch = 0 : i64, scratch_operands = 0 : i64, tpu.core_type = #tpu.core_type<tc>, window_params = [{transform_indices = @transform_0, window_bounds = array<i64: 2, 1024>}, {transform_indices = @transform_1, window_bounds = array<i64: 2, 1024>}]} {
    %c0 = arith.constant 0 : index
    %c0_0 = arith.constant 0 : index
    %0 = vector.load %arg1[%c0, %c0_0] : memref<2x1024xf32, #tpu.memory_space<vmem>>, vector<2x1024xf32>
    %cst = arith.constant 0.000000e+00 : f32
    %1 = vector.broadcast %cst : f32 to vector<2x1024xf32>
    %2 = arith.subf %1, %0 : vector<2x1024xf32>
    %3 = math.exp %2 : vector<2x1024xf32>
    %cst_1 = arith.constant 1.000000e+00 : f32
    %4 = vector.broadcast %cst_1 : f32 to vector<2x1024xf32>
    %5 = arith.addf %4, %3 : vector<2x1024xf32>
    %6 = math.rsqrt %5 : vector<2x1024xf32>
    %cst_2 = arith.constant 5.000000e-01 : f32
    %7 = vector.broadcast %cst_2 : f32 to vector<2x1024xf32>
    %8 = arith.mulf %7, %6 : vector<2x1024xf32>
    %c0_3 = arith.constant 0 : index
    %c0_4 = arith.constant 0 : index
    %9 = vector.load %arg2[%c0_3, %c0_4] : memref<2x1024xf32, #tpu.memory_space<vmem>>, vector<2x1024xf32>
    tpu.vector_store %arg2[%c0_3, %c0_4], %8 {strides = array<i32>} : memref<2x1024xf32, #tpu.memory_space<vmem>>, vector<2x1024xf32>,
    return
  }
  func.func @transform_0(%arg0: i32) -> (i32, i32) {
    %c0_i32 = arith.constant 0 : i32
    %c0_i32_0 = arith.constant 0 : i32
    return %arg0, %c0_i32 : i32, i32
  }
  func.func @transform_1(%arg0: i32) -> (i32, i32) {
    %c0_i32 = arith.constant 0 : i32
    %c0_i32_0 = arith.constant 0 : i32
    return %arg0, %c0_i32 : i32, i32
  }
}

</mosaic_0001>

<llo_original>
// kernel: tpu_custom_call.1
$region0: #{tpu_custom_call.1}
  #allocation0 [shape = 'u32[]', space=smem, size = 0x4, offset = 0x4, fixed_abs, tag = 'smem constant byte address 0x4 - core index']
  #allocation1 [shape = 'u32[144,128]{1,0:T(1,128)}', space=vmem, size = 0x12000, scoped, tag = 'internal scratch']
  %s0 = inlined_call_operand.hbm [shape: f32[2,1024], index: 0, kind: input, shape index: {}]
  %s1 = inlined_call_operand.hbm [shape: f32[2,1024], index: 1, kind: output, shape index: {}]
  %s2 = sld [smem:[#allocation0]]
  $region18: #{tpu_custom_call.1} parent=0
    _
  %s4 = ssub.s32 1, %s2
  %s5 = scalar_select 0, %s4, %s2
  $region1: #{tpu_custom_call.1} parent=0
    #allocation2 [shape = 'u8[8192]{0}', space=vmem, size = 0x2000, scoped, tag = 'input window, operand 0, single buffered']
    #allocation3 [shape = 's32[1]{0}', space=sflag, size = 0x4, scoped, tag = 'scoped memory for tpu_custom_call.1']
    #allocation4 [shape = 's32[1]{0}', space=sflag, size = 0x4, scoped, tag = 'scoped memory for tpu_custom_call.1']
    #allocation5 [shape = 'u8[8192]{0}', space=vmem, size = 0x2000, scoped, tag = 'output window, operand 0, single buffered']
    %6 = vsyncpa [#allocation3], 0
    %7 = vsyncpa [#allocation4], 0
    // Predicated region
    $region2: #{tpu_custom_call.1} parent=1 // pred_check
      _
    $region3: #{tpu_custom_call.1} parent=1 // pred_check_branch
      %9 = sbr.rel (0) target = $region5
    $region4: #{tpu_custom_call.1} parent=1 // pred_region
      %s11 = ssub.s32 256, 256
      %12 = vsyncadd [#allocation3], %s11
      %s14 = sshll.u32 [#allocation2], 4
      %s15 = int_to_ptr.vmem [resolvable:$true] %s14
      %17 = dma.hbm_to_vmem [thread:$0]  %s0, 256, %s15, [#allocation3]
    $region5: #{tpu_custom_call.1} parent=1 // pred_fallthru
      _
    // Predicated region
    $region6: #{tpu_custom_call.1} parent=1 // pred_check
      _
    $region7: #{tpu_custom_call.1} parent=1 // pred_check_branch
      %19 = sbr.rel (0) target = $region9
    $region8: #{tpu_custom_call.1} parent=1 // pred_region
      %20 = dma.done [#allocation3], 256
    $region9: #{tpu_custom_call.1} parent=1 // pred_fallthru
      _
    %v21 = vld [vmem:[#allocation2] sm:$0xff]
    %v22 = vld [vmem:[#allocation2 + $0x8] sm:$0xff]
    %v23 = vsub.f32 0.0, %v21
    %v24 = vsub.f32 0.0, %v22
    %v25 = vmul.f32 %v23, 1.442695
    %v26 = vpow.pop %v25
    %v27 = vmul.f32 %v24, 1.442695
    %v28 = vpow.pop %v27
    %v29 = vadd.f32 %v26, 1.0
    %v30 = vadd.f32 %v28, 1.0
    %v31 = vrsqrt.pop %v29
    %v32 = vrsqrt.pop %v30
    %v33 = vmul.f32 %v31, 0.5
    %v34 = vmul.f32 %v32, 0.5
    %35 = vst [vmem:[#allocation5] sm:$0xff] %v33
    %36 = vst [vmem:[#allocation5 + $0x8] sm:$0xff] %v34
    // Predicated region
    $region10: #{tpu_custom_call.1} parent=1 // pred_check
      _
    $region11: #{tpu_custom_call.1} parent=1 // pred_check_branch
      %38 = sbr.rel (0) target = $region13
    $region12: #{tpu_custom_call.1} parent=1 // pred_region
      %s40 = ssub.s32 256, 256
      %41 = vsyncadd [#allocation4], %s40
      %s43 = sshll.u32 [#allocation5], 4
      %s44 = int_to_ptr.vmem [resolvable:$true] %s43
      %46 = dma.vmem_to_hbm [thread:$0]  %s44, 256, %s1, [#allocation4]
    $region13: #{tpu_custom_call.1} parent=1 // pred_fallthru
      _
    // Predicated region
    $region14: #{tpu_custom_call.1} parent=1 // pred_check
      _
    $region15: #{tpu_custom_call.1} parent=1 // pred_check_branch
      %48 = sbr.rel (0) target = $region17
    $region16: #{tpu_custom_call.1} parent=1 // pred_region
      %49 = dma.done [#allocation4], 256
    $region17: #{tpu_custom_call.1} parent=1 // pred_fallthru
      _
    %50 = vsyncpa [#allocation3], 1
    %51 = vsyncpa [#allocation4], 1

</llo_original>
